<compile_context>
chip_gen: v7x
topology: tpu7x:2x2x1
jax: 0.10.0
libtpu: 0.0.40
codegen_flags: <defaults>
</compile_context>

<pallas_src>
import functools

import jax
import jax.numpy as jnp
from jax.experimental import pallas as pl
from jax.experimental.pallas import tpu as pltpu


def _make_pool_matrix(in_size: int, out_size: int) -> jnp.ndarray:
    """Exact adaptive-avg-pool averaging matrix of shape (out_size, in_size)."""
    o = jnp.arange(out_size)
    starts = (o * in_size) // out_size                      # floor(i*H/OH)
    ends = ((o + 1) * in_size + out_size - 1) // out_size   # ceil((i+1)*H/OH)
    idx = jnp.arange(in_size)
    mask = (idx[None, :] >= starts[:, None]) & (idx[None, :] < ends[:, None])
    counts = (ends - starts).astype(jnp.float32)
    return mask.astype(jnp.float32) / counts[:, None]


def _pool_kernel(m_ref, x_ref, o_ref):
    # m_ref: (QP, HW)   kron(P_h, P_w) pooling matrix (broadcast over grid)
    # x_ref: (B, HW)    B flattened planes (real & imag planes batched together)
    # o_ref: (1, QP, B) lane-dense output block (batch axis on lanes)
    o_ref[0] = jax.lax.dot_general(
        m_ref[...], x_ref[...],
        dimension_numbers=(((1,), (1,)), ((), ())),   # contract HW with HW
        preferred_element_type=jnp.float32,
    )


def _choose_batch(nc2: int, hw: int) -> int:
    """Planes per grid step: big enough to amortize DMA, small enough for VMEM."""
    plane_bytes = hw * 4
    budget = 4 * 1024 * 1024                     # target input-block size
    b_cap = max(8, (budget // plane_bytes) // 8 * 8)
    if nc2 <= b_cap:
        # Whole problem fits one block; still split in two (lane-dense halves)
        # when there is enough work so both v7x TensorCores get a grid step.
        if nc2 >= 256 and (nc2 // 2) % 128 == 0:
            return nc2 // 2
        return nc2
    if b_cap >= 128:
        return (b_cap // 128) * 128              # lane-dense output blocks
    return b_cap                                 # very large planes: few/step


@functools.partial(jax.jit, static_argnames=("output_size",))
def complex_adaptive_avg_pool2d(x: jnp.ndarray, output_size) -> jnp.ndarray:
    """x: complex64 (N, C, H, W)  ->  complex64 (N, C, OH, OW)."""
    n, c, h, w = x.shape
    if isinstance(output_size, int):
        oh = ow = output_size
    else:
        oh, ow = output_size
        oh = h if oh is None else oh
        ow = w if ow is None else ow

    nc = n * c
    nc2 = 2 * nc
    hw = h * w
    qp = oh * ow

    # Real / imag planes become extra batch entries (pooling is linear).
    xr = jnp.real(x).astype(jnp.float32).reshape(nc, hw)
    xi = jnp.imag(x).astype(jnp.float32).reshape(nc, hw)
    xf = jnp.concatenate([xr, xi], axis=0)                      # (2*N*C, H*W)

    b = _choose_batch(nc2, hw)
    g = -(-nc2 // b)                                            # cdiv
    nc2_pad = g * b
    if nc2_pad != nc2:
        xf = jnp.pad(xf, ((0, nc2_pad - nc2), (0, 0)))

    # Exact one-shot pooling matrix on flattened (H*W) planes.
    m = jnp.kron(_make_pool_matrix(h, oh), _make_pool_matrix(w, ow))  # (QP, HW)

    in_block_bytes = b * hw * 4
    m_bytes = qp * hw * 4
    out_block_bytes = qp * b * 4
    vmem_need = 2 * in_block_bytes + 2 * m_bytes + 2 * out_block_bytes
    vmem_limit = int(min(max(2 * vmem_need, 32 * 1024 * 1024), 48 * 1024 * 1024))

    out = pl.pallas_call(
        _pool_kernel,
        out_shape=jax.ShapeDtypeStruct((g, qp, b), jnp.float32),
        grid_spec=pltpu.PrefetchScalarGridSpec(
            num_scalar_prefetch=0,
            grid=(g,),
            in_specs=[
                pl.BlockSpec((qp, hw), lambda i: (0, 0)),   # pooling matrix
                pl.BlockSpec((b, hw), lambda i: (i, 0)),    # B planes per step
            ],
            out_specs=pl.BlockSpec((1, qp, b), lambda i: (i, 0, 0)),
        ),
        compiler_params=pltpu.CompilerParams(
            dimension_semantics=("parallel",),
            vmem_limit_bytes=vmem_limit,
        ),
        cost_estimate=pl.CostEstimate(
            flops=2 * nc2_pad * qp * hw,
            bytes_accessed=nc2_pad * hw * 4 + nc2_pad * qp * 4 + m_bytes,
            transcendentals=0,
        ),
    )(m, xf)

    # (G, QP, B) -> (nc2_pad, QP) -> split real/imag -> (N, C, OH, OW) complex64.
    out = out.transpose(0, 2, 1).reshape(nc2_pad, qp)[:nc2]
    out_r = out[:nc].reshape(n, c, oh, ow)
    out_i = out[nc:].reshape(n, c, oh, ow)
    return jax.lax.complex(out_r, out_i)


if __name__ == "__main__":
    key = jax.random.PRNGKey(0)
    kr, ki = jax.random.split(key)

    N, C, H, W = 2, 4, 16, 16
    OUTPUT_SIZE = (4, 4)

    x_real = jax.random.normal(kr, (N, C, H, W), dtype=jnp.float32)
    x_imag = jax.random.normal(ki, (N, C, H, W), dtype=jnp.float32)
    x = (x_real + 1j * x_imag).astype(jnp.complex64)

    out = complex_adaptive_avg_pool2d(x, OUTPUT_SIZE)
    out = jax.block_until_ready(out)

    # Pure-JAX reference (same adaptive-pool averaging matrices).
    ph = _make_pool_matrix(H, OUTPUT_SIZE[0])
    pw = _make_pool_matrix(W, OUTPUT_SIZE[1])
    ref_r = jnp.einsum("oh,nchw,pw->ncop", ph, x_real, pw)
    ref_i = jnp.einsum("oh,nchw,pw->ncop", ph, x_imag, pw)
    ref = (ref_r + 1j * ref_i).astype(jnp.complex64)

    assert out.shape == (N, C, OUTPUT_SIZE[0], OUTPUT_SIZE[1])
    assert out.dtype == jnp.complex64
    assert jnp.allclose(out, ref, atol=1e-5, rtol=1e-5)

    print("KERNEL_OK")
</pallas_src>

<mosaic_0001>
module attributes {stable_mosaic.version = 11 : i64} {
  func.func @_pool_kernel(%arg0: i32, %arg1: memref<16x256xf32, #tpu.memory_space<vmem>>, %arg2: memref<16x256xf32, #tpu.memory_space<vmem>>, %arg3: memref<1x16x16xf32, #tpu.memory_space<vmem>>) attributes {dimension_semantics = [#tpu.dimension_semantics<parallel>], iteration_bounds = array<i64: 1>, scalar_prefetch = 0 : i64, scratch_operands = 0 : i64, tpu.core_type = #tpu.core_type<tc>, window_params = [{pipeline_mode = #tpu.pipeline_mode<synchronous>, transform_indices = @transform_0, window_bounds = array<i64: 16, 256>}, {transform_indices = @transform_1, window_bounds = array<i64: 16, 256>}, {transform_indices = @transform_2, window_bounds = array<i64: 1, 16, 16>}]} {
    %c0 = arith.constant 0 : index
    %c0_0 = arith.constant 0 : index
    %0 = vector.load %arg1[%c0, %c0_0] : memref<16x256xf32, #tpu.memory_space<vmem>>, vector<16x256xf32>
    %c0_1 = arith.constant 0 : index
    %c0_2 = arith.constant 0 : index
    %1 = vector.load %arg2[%c0_1, %c0_2] : memref<16x256xf32, #tpu.memory_space<vmem>>, vector<16x256xf32>
    %cst = arith.constant dense<0.000000e+00> : vector<16x16xf32>
    %2 = tpu.matmul %0, %1, %cst {dimension_numbers = #tpu.dot_dimension_numbers<[1], [1], [0], [0], [0, 0, 1, 0], [], []>} : vector<16x256xf32>, vector<16x256xf32>, vector<16x16xf32> -> vector<16x16xf32>
    %c0_3 = arith.constant 0 : index
    %c0_4 = arith.constant 0 : index
    %c0_5 = arith.constant 0 : index
    %3 = vector.load %arg3[%c0_3, %c0_4, %c0_5] : memref<1x16x16xf32, #tpu.memory_space<vmem>>, vector<1x16x16xf32>
    %4 = vector.shape_cast %3 : vector<1x16x16xf32> to vector<16x16xf32>
    %5 = vector.shape_cast %2 : vector<16x16xf32> to vector<1x16x16xf32>
    tpu.vector_store %arg3[%c0_3, %c0_4, %c0_5], %5 {strides = array<i32>} : memref<1x16x16xf32, #tpu.memory_space<vmem>>, vector<1x16x16xf32>,
    return
  }
  func.func @transform_0(%arg0: i32) -> (i32, i32) {
    %c0_i32 = arith.constant 0 : i32
    %c0_i32_0 = arith.constant 0 : i32
    %c0_i32_1 = arith.constant 0 : i32
    return %c0_i32, %c0_i32_0 : i32, i32
  }
  func.func @transform_1(%arg0: i32) -> (i32, i32) {
    %c0_i32 = arith.constant 0 : i32
    %c0_i32_0 = arith.constant 0 : i32
    return %arg0, %c0_i32 : i32, i32
  }
  func.func @transform_2(%arg0: i32) -> (i32, i32, i32) {
    %c0_i32 = arith.constant 0 : i32
    %c0_i32_0 = arith.constant 0 : i32
    %c0_i32_1 = arith.constant 0 : i32
    return %arg0, %c0_i32, %c0_i32_0 : i32, i32, i32
  }
}

</mosaic_0001>

<llo_original>
// kernel: custom-call
$region0: #{custom-call}
  %s0 = inlined_call_operand.hbm [shape: c64[2,4,16,16], index: 0, kind: input, shape index: {}]
  %s1 = inlined_call_operand.vmem [shape: f32[2,4,16,16], index: 1, kind: output, shape index: {}]
  $region1: #{custom-call} parent=0
    #allocation0 [shape = 's32[1]{0}', space=sflag, size = 0x4, scoped, tag = 'scoped memory for custom-call']
    %2 = vsyncpa [#allocation0], 0
    %s3 = sshll.u32 %s1, 4
    %s4 = int_to_ptr.vmem [resolvable:$true] %s3
    %6 = dma.hbm_to_vmem [thread:$0]  %s0, 2048, %s4, [#allocation0]
    %7 = dma.done [#allocation0], 2048
    %8 = vsyncpa [#allocation0], 1

// kernel: custom-call.1
$region0: #{custom-call.1}
  %s0 = inlined_call_operand.hbm [shape: c64[2,4,16,16], index: 0, kind: input, shape index: {}]
  %s1 = inlined_call_operand.vmem [shape: f32[2,4,16,16], index: 1, kind: output, shape index: {}]
  %s2 = scalar_lea.hbm %s0, 2048
  $region1: #{custom-call.1} parent=0
    #allocation0 [shape = 's32[1]{0}', space=sflag, size = 0x4, scoped, tag = 'scoped memory for custom-call.1']
    %3 = vsyncpa [#allocation0], 0
    %s4 = sshll.u32 %s1, 4
    %s5 = int_to_ptr.vmem [resolvable:$true] %s4
    %7 = dma.hbm_to_vmem [thread:$0]  %s2, 2048, %s5, [#allocation0]
    %8 = dma.done [#allocation0], 2048
    %9 = vsyncpa [#allocation0], 1

// kernel: custom-call.2
$region0: #{custom-call.2}
  %s0 = inlined_call_operand.vmem [shape: f32[2,4,4,4], index: 0, kind: input, shape index: {}]
  %s1 = inlined_call_operand.vmem [shape: f32[2,4,4,4], index: 1, kind: input, shape index: {}]
  %s2 = inlined_call_operand.hbm [shape: c64[2,4,4,4], index: 2, kind: output, shape index: {}]
  %s3 = scalar_lea.hbm %s2, 512
  $region1: #{custom-call.2} parent=0
    #allocation0 [shape = 's32[1]{0}', space=sflag, size = 0x4, scoped, tag = 'scoped memory for custom-call.2']
    %4 = vsyncpa [#allocation0], 0
    %s5 = sshll.u32 %s0, 4
    %s6 = int_to_ptr.vmem [resolvable:$true] %s5
    %8 = dma.vmem_to_hbm [thread:$0]  %s6, 512, %s2, [#allocation0]
    %9 = dma.done [#allocation0], 512
    %10 = vsyncpa [#allocation0], 1
  $region2: #{custom-call.2} parent=0
    #allocation1 [shape = 's32[1]{0}', space=sflag, size = 0x4, scoped, tag = 'scoped memory for custom-call.2']
    %11 = vsyncpa [#allocation1], 0
    %s12 = sshll.u32 %s1, 4
    %s13 = int_to_ptr.vmem [resolvable:$true] %s12
    %15 = dma.vmem_to_hbm [thread:$0]  %s13, 512, %s3, [#allocation1]
    %16 = dma.done [#allocation1], 512
    %17 = vsyncpa [#allocation1], 1

// kernel: complex_adaptive_avg_pool2d.1
$region0: #{complex_adaptive_avg_pool2d.1}
  #allocation0 [shape = 'u32[]', space=smem, size = 0x4, offset = 0x4, fixed_abs, tag = 'smem constant byte address 0x4 - core index']
  #allocation1 [shape = 'u32[144,128]{1,0:T(1,128)}', space=vmem, size = 0x12000, scoped, tag = 'internal scratch']
  %s0 = inlined_call_operand.vmem [shape: f32[16,256], index: 0, kind: input, shape index: {}]
  %s1 = inlined_call_operand.vmem [shape: f32[16,256], index: 1, kind: input, shape index: {}]
  %s2 = inlined_call_operand.vmem [shape: f32[1,16,16], index: 2, kind: output, shape index: {}]
  %s3 = sld [smem:[#allocation0]]
  $region18: #{complex_adaptive_avg_pool2d.1} parent=0
    _
  %s5 = ssub.s32 1, %s3
  %s6 = scalar_select 0, %s5, %s3
  // Predicated region
  $region2: #{complex_adaptive_avg_pool2d.1} parent=0 // pred_check
    _
  $region3: #{complex_adaptive_avg_pool2d.1} parent=0 // pred_check_branch
    %8 = sbr.rel (0) target = $region5
  $region4: #{complex_adaptive_avg_pool2d.1} parent=0 // pred_region
    _
  $region5: #{complex_adaptive_avg_pool2d.1} parent=0 // pred_fallthru
    _
  // Predicated region
  $region6: #{complex_adaptive_avg_pool2d.1} parent=0 // pred_check
    _
  $region7: #{complex_adaptive_avg_pool2d.1} parent=0 // pred_check_branch
    %10 = sbr.rel (0) target = $region9
  $region8: #{complex_adaptive_avg_pool2d.1} parent=0 // pred_region
    _
  $region9: #{complex_adaptive_avg_pool2d.1} parent=0 // pred_fallthru
    _
  %v11 = vld [vmem:[%s0] sm:$0xff]
  %v12 = vld [vmem:[%s0 + $0x8] sm:$0xff]
  %v13 = vld [vmem:[%s0 + $0x10] sm:$0xff]
  %v14 = vld [vmem:[%s0 + $0x18] sm:$0xff]
  %v15 = vld [vmem:[%s1] sm:$0xff]
  %v16 = vld [vmem:[%s1 + $0x8] sm:$0xff]
  %v17 = vld [vmem:[%s1 + $0x10] sm:$0xff]
  %v18 = vld [vmem:[%s1 + $0x18] sm:$0xff]
  %19 = vmatprep.subr.mxu0 %v16
  %20 = vmatpush1.xpose.msra.mxu0 %v15
  %21 = vmatprep.subr.mxu0 %v18
  %22 = vmatpush1.xpose.msra.mxu0 %v17
  %23 = vmatprep.subr.mxu0 0.0
  %24 = vmatpush1.xpose.msra.mxu0 0.0
  %25 = vmatprep.subr.mxu0 0.0
  %26 = vmatpush1.xpose.msra.mxu0 0.0
  %27 = vmatprep.subr.mxu0 0.0
  %28 = vmatpush1.xpose.msra.mxu0 0.0
  %29 = vmatprep.subr.mxu0 0.0
  %30 = vmatpush1.xpose.msra.mxu0 0.0
  %31 = vmatprep.subr.mxu0 0.0
  %32 = vmatpush1.xpose.msra.mxu0 0.0
  %33 = vmatprep.subr.mxu0 0.0
  %34 = vmatpush1.xpose.msra.mxu0 0.0
  %35 = vmatprep.subr.mxu0 0.0
  %36 = vmatpush1.xpose.msra.mxu0 0.0
  %37 = vmatprep.subr.mxu0 0.0
  %38 = vmatpush1.xpose.msra.mxu0 0.0
  %39 = vmatprep.subr.mxu0 0.0
  %40 = vmatpush1.xpose.msra.mxu0 0.0
  %41 = vmatprep.subr.mxu0 0.0
  %42 = vmatpush1.xpose.msra.mxu0 0.0
  %43 = vmatprep.subr.mxu0 0.0
  %44 = vmatpush1.xpose.msra.mxu0 0.0
  %45 = vmatprep.subr.mxu0 0.0
  %46 = vmatpush1.xpose.msra.mxu0 0.0
  %47 = vmatprep.subr.mxu0 0.0
  %48 = vmatpush1.xpose.msra.mxu0 0.0
  %49 = vmatprep.subr.mxu0 0.0
  %50 = vmatpush1.xpose.msra.mxu0 0.0
  %51 = vmatprep.subr.mxu0 0.0
  %52 = vmatpush1.xpose.msra.mxu0 0.0
  %53 = vmatprep.subr.mxu0 0.0
  %54 = vmatpush1.xpose.msra.mxu0 0.0
  %55 = vmatprep.subr.mxu0 0.0
  %56 = vmatpush1.xpose.msra.mxu0 0.0
  %57 = vmatprep.subr.mxu0 0.0
  %58 = vmatpush1.xpose.msra.mxu0 0.0
  %59 = vmatprep.subr.mxu0 0.0
  %60 = vmatpush1.xpose.msra.mxu0 0.0
  %61 = vmatprep.subr.mxu0 0.0
  %62 = vmatpush1.xpose.msra.mxu0 0.0
  %63 = vmatprep.subr.mxu0 0.0
  %64 = vmatpush1.xpose.msra.mxu0 0.0
  %65 = vmatprep.subr.mxu0 0.0
  %66 = vmatpush1.xpose.msra.mxu0 0.0
  %67 = vmatprep.subr.mxu0 0.0
  %68 = vmatpush1.xpose.msra.mxu0 0.0
  %69 = vmatprep.subr.mxu0 0.0
  %70 = vmatpush1.xpose.msra.mxu0 0.0
  %71 = vmatprep.subr.mxu0 0.0
  %72 = vmatpush1.xpose.msra.mxu0 0.0
  %73 = vmatprep.subr.mxu0 0.0
  %74 = vmatpush1.xpose.msra.mxu0 0.0
  %75 = vmatprep.subr.mxu0 0.0
  %76 = vmatpush1.xpose.msra.mxu0 0.0
  %77 = vmatprep.subr.mxu0 0.0
  %78 = vmatpush1.xpose.msra.mxu0 0.0
  %79 = vmatprep.subr.mxu0 0.0
  %80 = vmatpush1.xpose.msra.mxu0 0.0
  %81 = vmatprep.subr.mxu0 0.0
  %82 = vmatpush1.xpose.msra.mxu0 0.0
  %83 = vmatprep.mubr.f32.mxu0 %v12
  %84 = vmatmul.mubr.f32.gmra.mrb[0].mxu0 %v11
  %v85 = vpop.f32.mrb[0].mxu0
  %v86 = vadd.f32 0.0, %v85
  %v87 = vpop.f32.mrb[0].mxu0
  %88 = vmatprep.mubr.f32.mxu0 %v14
  %89 = vmatmul.mubr.f32.gmra.mrb[0].mxu0 %v13
  %v90 = vpop.f32.mrb[0].mxu0
  %v91 = vadd.f32 0.0, %v90
  %v92 = vpop.f32.mrb[0].mxu0
  %93 = vdwg.mxu0
  %vm94 = vcmask 130048
  %95 = vst.msk [vmem:[%s2] sm:$0xff] %vm94, %v86
  %96 = vst.msk [vmem:[%s2 + $0x8] sm:$0xff] %vm94, %v91
  // Predicated region
  $region10: #{complex_adaptive_avg_pool2d.1} parent=0 // pred_check
    _
  $region11: #{complex_adaptive_avg_pool2d.1} parent=0 // pred_check_branch
    %98 = sbr.rel (0) target = $region13
  $region12: #{complex_adaptive_avg_pool2d.1} parent=0 // pred_region
    _
  $region13: #{complex_adaptive_avg_pool2d.1} parent=0 // pred_fallthru
    _
  // Predicated region
  $region14: #{complex_adaptive_avg_pool2d.1} parent=0 // pred_check
    _
  $region15: #{complex_adaptive_avg_pool2d.1} parent=0 // pred_check_branch
    %100 = sbr.rel (0) target = $region17
  $region16: #{complex_adaptive_avg_pool2d.1} parent=0 // pred_region
    _
  $region17: #{complex_adaptive_avg_pool2d.1} parent=0 // pred_fallthru
    _

</llo_original>
